<compile_context>
chip_gen: v5e
topology: v5e:2x2
jax: 0.10.0
libtpu: 0.0.40
codegen_flags: <defaults>
</compile_context>

<pallas_src>
import jax
import jax.numpy as jnp
import numpy as np
from jax.experimental import pallas as pl
from jax.experimental.pallas import tpu as pltpu

# ---- fixed, small configuration consistent with BiTCN.__init__ ----
N = 2                      # batch
C_IN = 4                   # input_size
L = 16                     # seq_len
NUM_CHANNELS = (8, 16)     # num_channels
K = 3                      # kernel_size (odd -> 'same' length, padding (K-1)//2)
O = 5                      # output_size
PAD = (K - 1) // 2
NL = N * L                 # rows of the activation slab


def bitcn_kernel(x_ref,
                 w0_ref, b0_ref, s0w_ref, s0b_ref,
                 w1_ref, b1_ref, s1w_ref, s1b_ref,
                 wc_ref, bl_ref,
                 keep_first_ref, keep_last_ref,
                 diag_ref, lane_sel_ref, seg_ref,
                 out_ref):
    """Whole forward pass for all N batch elements in one invocation."""
    h = x_ref[...]                                   # (N*L, C_IN) f32
    keep_first = keep_first_ref[...]                 # (N*L, 1): 0 where l == 0
    keep_last = keep_last_ref[...]                   # (N*L, 1): 0 where l == L-1

    def residual_conv_block(h, w_ref, b_ref, sw_ref, sb_ref):
        # shortcut: 1x1 conv (identity weights are passed when cin == cout)
        residual = jnp.dot(h, sw_ref[...],
                           preferred_element_type=jnp.float32) + sb_ref[...]
        # 'same' conv as one im2col matmul: shifted copies via XLU roll,
        # zero-padding at sequence boundaries via precomputed 0/1 masks.
        prev = pltpu.roll(h, 1, axis=0) * keep_first        # x[l-1]
        nxt = pltpu.roll(h, NL - 1, axis=0) * keep_last     # x[l+1]
        cols = jnp.concatenate([prev, h, nxt], axis=1)      # (N*L, K*cin)
        out = jnp.dot(cols, w_ref[...],
                      preferred_element_type=jnp.float32) + b_ref[...]
        out = jnp.maximum(out, 0.0)                         # ReLU
        # TODO(synk): nn.Dropout treated as identity (inference/eval semantics).
        return out + residual

    h = residual_conv_block(h, w0_ref, b0_ref, s0w_ref, s0b_ref)   # (N*L, C0)
    h = residual_conv_block(h, w1_ref, b1_ref, s1w_ref, s1b_ref)   # (N*L, C1)

    # Final Linear: out[n, o] = sum_{l, c} h[n*L + l, c] * W[l, c, o] + b[o]
    # One real contraction over channels, then two tiny constant selector
    # matmuls (pick the l-block matching each row, then segment-sum per batch).
    g = jnp.dot(h, wc_ref[...], preferred_element_type=jnp.float32)  # (N*L, L*O)
    g = g * diag_ref[...]                                            # keep l' == l(row)
    d = jnp.dot(g, lane_sel_ref[...],
                preferred_element_type=jnp.float32)                  # (N*L, O)
    out_ref[...] = (jnp.dot(seg_ref[...], d,
                            preferred_element_type=jnp.float32)
                    + bl_ref[...])                                   # (N, O)


def bitcn_forward(x_ncl, params):
    """x_ncl: (N, C_IN, L) float32, PyTorch layout. Returns (N, O)."""
    C0, C1 = NUM_CHANNELS
    # (N, C, L) -> (N, L, C) -> (N*L, C) slab (glue only)
    x_slab = jnp.transpose(x_ncl, (0, 2, 1)).astype(jnp.float32).reshape(NL, C_IN)

    def conv_w(w):
        # (Cout, Cin, K) -> (K*Cin, Cout); rows ordered [tap k=0 | k=1 | k=2]
        return jnp.transpose(w, (2, 1, 0)).reshape(K * w.shape[1], w.shape[0])

    def shortcut_w(sw, sb, cin, cout):
        if sw is None:                 # nn.Identity() when cin == cout
            return jnp.eye(cin, dtype=jnp.float32), jnp.zeros((1, cout), jnp.float32)
        return jnp.transpose(sw[:, :, 0], (1, 0)), sb.reshape(1, -1)

    (w0, b0, s0w, s0b), (w1, b1, s1w, s1b) = params["layers"]
    w0k, b0k = conv_w(w0), b0.reshape(1, -1)
    s0wk, s0bk = shortcut_w(s0w, s0b, C_IN, C0)
    w1k, b1k = conv_w(w1), b1.reshape(1, -1)
    s1wk, s1bk = shortcut_w(s1w, s1b, C0, C1)

    # Linear weight (O, C1*L), torch flatten index c*L + l  ->  (C1, L*O)
    wc = jnp.transpose(params["Wlin"].reshape(O, C1, L), (1, 2, 0)).reshape(C1, L * O)
    blk = params["blin"].reshape(1, -1)

    # Tiny constant masks / selectors (built host-side, no in-kernel int div/mod).
    l_idx = np.arange(NL) % L
    keep_first = jnp.asarray((l_idx != 0).astype(np.float32).reshape(NL, 1))
    keep_last = jnp.asarray((l_idx != L - 1).astype(np.float32).reshape(NL, 1))
    lane_l = np.arange(L * O) // O
    diag_mask = jnp.asarray((lane_l[None, :] == l_idx[:, None]).astype(np.float32))
    lane_sel = jnp.asarray(
        (np.arange(L * O)[:, None] % O == np.arange(O)[None, :]).astype(np.float32))
    seg = jnp.asarray(
        (np.arange(NL)[None, :] // L == np.arange(N)[:, None]).astype(np.float32))

    inputs = (x_slab,
              w0k, b0k, s0wk, s0bk,
              w1k, b1k, s1wk, s1bk,
              wc, blk,
              keep_first, keep_last, diag_mask, lane_sel, seg)

    def fullspec(a):
        nd = a.ndim
        return pl.BlockSpec(a.shape, lambda i, _nd=nd: (0,) * _nd)

    out = pl.pallas_call(
        bitcn_kernel,
        out_shape=jax.ShapeDtypeStruct((N, O), jnp.float32),
        grid_spec=pltpu.PrefetchScalarGridSpec(
            num_scalar_prefetch=0,
            grid=(1,),
            in_specs=[fullspec(a) for a in inputs],
            out_specs=pl.BlockSpec((N, O), lambda i: (0, 0)),
        ),
        compiler_params=pltpu.CompilerParams(
            dimension_semantics=("arbitrary",)),
    )(*inputs)
    return out


def init_params(key):
    """Deterministic parameter init in PyTorch layouts (uniform +/- 1/sqrt(fan_in))."""
    keys = jax.random.split(key, 4 * len(NUM_CHANNELS) + 2)

    def u(k, shape, fan_in):
        bound = 1.0 / float(np.sqrt(fan_in))
        return jax.random.uniform(k, shape, jnp.float32, -bound, bound)

    layers, cin, i = [], C_IN, 0
    for cout in NUM_CHANNELS:
        w = u(keys[i], (cout, cin, K), cin * K); i += 1
        b = u(keys[i], (cout,), cin * K); i += 1
        if cin != cout:            # PyTorch only adds the 1x1 shortcut conv here
            sw = u(keys[i], (cout, cin, 1), cin); i += 1
            sb = u(keys[i], (cout,), cin); i += 1
        else:
            sw, sb = None, None; i += 2
        layers.append((w, b, sw, sb))
        cin = cout
    Wlin = u(keys[i], (O, NUM_CHANNELS[-1] * L), NUM_CHANNELS[-1] * L); i += 1
    blin = u(keys[i], (O,), NUM_CHANNELS[-1] * L); i += 1
    return {"layers": layers, "Wlin": Wlin, "blin": blin}


def ref_forward(x_ncl, params):
    """Pure-JAX reference matching the PyTorch module (eval mode)."""
    h = x_ncl
    for (w, b, sw, sb) in params["layers"]:
        if sw is None:
            res = h
        else:
            res = jax.lax.conv_general_dilated(
                h, sw, (1,), [(0, 0)],
                dimension_numbers=("NCH", "OIH", "NCH")) + sb[None, :, None]
        out = jax.lax.conv_general_dilated(
            h, w, (1,), [(PAD, PAD)],
            dimension_numbers=("NCH", "OIH", "NCH")) + b[None, :, None]
        out = jnp.maximum(out, 0.0)
        h = out + res
    y = h.reshape(h.shape[0], -1)
    return y @ params["Wlin"].T + params["blin"]


if __name__ == "__main__":
    key = jax.random.PRNGKey(0)
    pkey, xkey = jax.random.split(key)
    params = init_params(pkey)
    x = jax.random.normal(xkey, (N, C_IN, L), jnp.float32)

    out = jax.block_until_ready(bitcn_forward(x, params))
    ref = jax.block_until_ready(ref_forward(x, params))

    assert out.shape == (N, O)
    err = float(np.max(np.abs(np.asarray(out) - np.asarray(ref))))
    if not np.allclose(np.asarray(out), np.asarray(ref), rtol=2e-3, atol=2e-3):
        raise AssertionError(f"kernel/reference mismatch, max abs err = {err}")
    print("KERNEL_OK")
</pallas_src>

<mosaic_0001>
module attributes {stable_mosaic.version = 11 : i64} {
  func.func @bitcn_kernel(%arg0: i32, %arg1: memref<32x4xf32, #tpu.memory_space<vmem>>, %arg2: memref<12x8xf32, #tpu.memory_space<vmem>>, %arg3: memref<1x8xf32, #tpu.memory_space<vmem>>, %arg4: memref<4x8xf32, #tpu.memory_space<vmem>>, %arg5: memref<1x8xf32, #tpu.memory_space<vmem>>, %arg6: memref<24x16xf32, #tpu.memory_space<vmem>>, %arg7: memref<1x16xf32, #tpu.memory_space<vmem>>, %arg8: memref<8x16xf32, #tpu.memory_space<vmem>>, %arg9: memref<1x16xf32, #tpu.memory_space<vmem>>, %arg10: memref<16x80xf32, #tpu.memory_space<vmem>>, %arg11: memref<1x5xf32, #tpu.memory_space<vmem>>, %arg12: memref<32x1xf32, #tpu.memory_space<vmem>>, %arg13: memref<32x1xf32, #tpu.memory_space<vmem>>, %arg14: memref<32x80xf32, #tpu.memory_space<vmem>>, %arg15: memref<80x5xf32, #tpu.memory_space<vmem>>, %arg16: memref<2x32xf32, #tpu.memory_space<vmem>>, %arg17: memref<2x5xf32, #tpu.memory_space<vmem>>) attributes {dimension_semantics = [#tpu.dimension_semantics<arbitrary>], iteration_bounds = array<i64: 1>, scalar_prefetch = 0 : i64, scratch_operands = 0 : i64, tpu.core_type = #tpu.core_type<tc>, window_params = [{pipeline_mode = #tpu.pipeline_mode<synchronous>, transform_indices = @transform_0, window_bounds = array<i64: 32, 4>}, {pipeline_mode = #tpu.pipeline_mode<synchronous>, transform_indices = @transform_1, window_bounds = array<i64: 12, 8>}, {pipeline_mode = #tpu.pipeline_mode<synchronous>, transform_indices = @transform_2, window_bounds = array<i64: 1, 8>}, {pipeline_mode = #tpu.pipeline_mode<synchronous>, transform_indices = @transform_3, window_bounds = array<i64: 4, 8>}, {pipeline_mode = #tpu.pipeline_mode<synchronous>, transform_indices = @transform_4, window_bounds = array<i64: 1, 8>}, {pipeline_mode = #tpu.pipeline_mode<synchronous>, transform_indices = @transform_5, window_bounds = array<i64: 24, 16>}, {pipeline_mode = #tpu.pipeline_mode<synchronous>, transform_indices = @transform_6, window_bounds = array<i64: 1, 16>}, {pipeline_mode = #tpu.pipeline_mode<synchronous>, transform_indices = @transform_7, window_bounds = array<i64: 8, 16>}, {pipeline_mode = #tpu.pipeline_mode<synchronous>, transform_indices = @transform_8, window_bounds = array<i64: 1, 16>}, {pipeline_mode = #tpu.pipeline_mode<synchronous>, transform_indices = @transform_9, window_bounds = array<i64: 16, 80>}, {pipeline_mode = #tpu.pipeline_mode<synchronous>, transform_indices = @transform_10, window_bounds = array<i64: 1, 5>}, {pipeline_mode = #tpu.pipeline_mode<synchronous>, transform_indices = @transform_11, window_bounds = array<i64: 32, 1>}, {pipeline_mode = #tpu.pipeline_mode<synchronous>, transform_indices = @transform_12, window_bounds = array<i64: 32, 1>}, {pipeline_mode = #tpu.pipeline_mode<synchronous>, transform_indices = @transform_13, window_bounds = array<i64: 32, 80>}, {pipeline_mode = #tpu.pipeline_mode<synchronous>, transform_indices = @transform_14, window_bounds = array<i64: 80, 5>}, {pipeline_mode = #tpu.pipeline_mode<synchronous>, transform_indices = @transform_15, window_bounds = array<i64: 2, 32>}, {pipeline_mode = #tpu.pipeline_mode<synchronous>, transform_indices = @transform_16, window_bounds = array<i64: 2, 5>}]} {
    %c0 = arith.constant 0 : index
    %c0_0 = arith.constant 0 : index
    %0 = vector.load %arg1[%c0, %c0_0] : memref<32x4xf32, #tpu.memory_space<vmem>>, vector<32x4xf32>
    %c0_1 = arith.constant 0 : index
    %c0_2 = arith.constant 0 : index
    %1 = vector.load %arg12[%c0_1, %c0_2] : memref<32x1xf32, #tpu.memory_space<vmem>>, vector<32x1xf32>
    %c0_3 = arith.constant 0 : index
    %c0_4 = arith.constant 0 : index
    %2 = vector.load %arg13[%c0_3, %c0_4] : memref<32x1xf32, #tpu.memory_space<vmem>>, vector<32x1xf32>
    %c0_5 = arith.constant 0 : index
    %c0_6 = arith.constant 0 : index
    %3 = vector.load %arg4[%c0_5, %c0_6] : memref<4x8xf32, #tpu.memory_space<vmem>>, vector<4x8xf32>
    %cst = arith.constant dense<0.000000e+00> : vector<32x8xf32>
    %4 = tpu.matmul %0, %3, %cst {dimension_numbers = #tpu.dot_dimension_numbers<[1], [0], [0], [1], [0, 0, 1, 1], [], []>} : vector<32x4xf32>, vector<4x8xf32>, vector<32x8xf32> -> vector<32x8xf32>
    %c0_7 = arith.constant 0 : index
    %c0_8 = arith.constant 0 : index
    %5 = vector.load %arg5[%c0_7, %c0_8] : memref<1x8xf32, #tpu.memory_space<vmem>>, vector<1x8xf32>
    %6 = vector.broadcast %5 : vector<1x8xf32> to vector<32x8xf32>
    %7 = arith.addf %4, %6 : vector<32x8xf32>
    %c1_i32 = arith.constant 1 : i32
    %8 = tpu.dynamic_rotate %0 by %c1_i32 dim 0 : vector<32x4xf32>, i32 -> vector<32x4xf32>
    %9 = vector.broadcast %1 : vector<32x1xf32> to vector<32x4xf32>
    %10 = arith.mulf %8, %9 : vector<32x4xf32>
    %c31_i32 = arith.constant 31 : i32
    %11 = tpu.dynamic_rotate %0 by %c31_i32 dim 0 : vector<32x4xf32>, i32 -> vector<32x4xf32>
    %12 = vector.broadcast %2 : vector<32x1xf32> to vector<32x4xf32>
    %13 = arith.mulf %11, %12 : vector<32x4xf32>
    %14 = tpu.concatenate %10, %0, %13 in 1 : vector<32x4xf32>, vector<32x4xf32>, vector<32x4xf32> -> vector<32x12xf32>
    %c0_9 = arith.constant 0 : index
    %c0_10 = arith.constant 0 : index
    %15 = vector.load %arg2[%c0_9, %c0_10] : memref<12x8xf32, #tpu.memory_space<vmem>>, vector<12x8xf32>
    %cst_11 = arith.constant dense<0.000000e+00> : vector<32x8xf32>
    %16 = tpu.matmul %14, %15, %cst_11 {dimension_numbers = #tpu.dot_dimension_numbers<[1], [0], [0], [1], [0, 0, 1, 1], [], []>} : vector<32x12xf32>, vector<12x8xf32>, vector<32x8xf32> -> vector<32x8xf32>
    %c0_12 = arith.constant 0 : index
    %c0_13 = arith.constant 0 : index
    %17 = vector.load %arg3[%c0_12, %c0_13] : memref<1x8xf32, #tpu.memory_space<vmem>>, vector<1x8xf32>
    %18 = vector.broadcast %17 : vector<1x8xf32> to vector<32x8xf32>
    %19 = arith.addf %16, %18 : vector<32x8xf32>
    %cst_14 = arith.constant 0.000000e+00 : f32
    %20 = vector.broadcast %cst_14 : f32 to vector<32x8xf32>
    %21 = arith.maximumf %19, %20 : vector<32x8xf32>
    %22 = arith.addf %21, %7 : vector<32x8xf32>
    %c0_15 = arith.constant 0 : index
    %c0_16 = arith.constant 0 : index
    %23 = vector.load %arg8[%c0_15, %c0_16] : memref<8x16xf32, #tpu.memory_space<vmem>>, vector<8x16xf32>
    %cst_17 = arith.constant dense<0.000000e+00> : vector<32x16xf32>
    %24 = tpu.matmul %22, %23, %cst_17 {dimension_numbers = #tpu.dot_dimension_numbers<[1], [0], [0], [1], [0, 0, 1, 1], [], []>} : vector<32x8xf32>, vector<8x16xf32>, vector<32x16xf32> -> vector<32x16xf32>
    %c0_18 = arith.constant 0 : index
    %c0_19 = arith.constant 0 : index
    %25 = vector.load %arg9[%c0_18, %c0_19] : memref<1x16xf32, #tpu.memory_space<vmem>>, vector<1x16xf32>
    %26 = vector.broadcast %25 : vector<1x16xf32> to vector<32x16xf32>
    %27 = arith.addf %24, %26 : vector<32x16xf32>
    %c1_i32_20 = arith.constant 1 : i32
    %28 = tpu.dynamic_rotate %22 by %c1_i32_20 dim 0 : vector<32x8xf32>, i32 -> vector<32x8xf32>
    %29 = vector.broadcast %1 : vector<32x1xf32> to vector<32x8xf32>
    %30 = arith.mulf %28, %29 : vector<32x8xf32>
    %c31_i32_21 = arith.constant 31 : i32
    %31 = tpu.dynamic_rotate %22 by %c31_i32_21 dim 0 : vector<32x8xf32>, i32 -> vector<32x8xf32>
    %32 = vector.broadcast %2 : vector<32x1xf32> to vector<32x8xf32>
    %33 = arith.mulf %31, %32 : vector<32x8xf32>
    %34 = tpu.concatenate %30, %22, %33 in 1 : vector<32x8xf32>, vector<32x8xf32>, vector<32x8xf32> -> vector<32x24xf32>
    %c0_22 = arith.constant 0 : index
    %c0_23 = arith.constant 0 : index
    %35 = vector.load %arg6[%c0_22, %c0_23] : memref<24x16xf32, #tpu.memory_space<vmem>>, vector<24x16xf32>
    %cst_24 = arith.constant dense<0.000000e+00> : vector<32x16xf32>
    %36 = tpu.matmul %34, %35, %cst_24 {dimension_numbers = #tpu.dot_dimension_numbers<[1], [0], [0], [1], [0, 0, 1, 1], [], []>} : vector<32x24xf32>, vector<24x16xf32>, vector<32x16xf32> -> vector<32x16xf32>
    %c0_25 = arith.constant 0 : index
    %c0_26 = arith.constant 0 : index
    %37 = vector.load %arg7[%c0_25, %c0_26] : memref<1x16xf32, #tpu.memory_space<vmem>>, vector<1x16xf32>
    %38 = vector.broadcast %37 : vector<1x16xf32> to vector<32x16xf32>
    %39 = arith.addf %36, %38 : vector<32x16xf32>
    %cst_27 = arith.constant 0.000000e+00 : f32
    %40 = vector.broadcast %cst_27 : f32 to vector<32x16xf32>
    %41 = arith.maximumf %39, %40 : vector<32x16xf32>
    %42 = arith.addf %41, %27 : vector<32x16xf32>
    %c0_28 = arith.constant 0 : index
    %c0_29 = arith.constant 0 : index
    %43 = vector.load %arg10[%c0_28, %c0_29] : memref<16x80xf32, #tpu.memory_space<vmem>>, vector<16x80xf32>
    %cst_30 = arith.constant dense<0.000000e+00> : vector<32x80xf32>
    %44 = tpu.matmul %42, %43, %cst_30 {dimension_numbers = #tpu.dot_dimension_numbers<[1], [0], [0], [1], [0, 0, 1, 1], [], []>} : vector<32x16xf32>, vector<16x80xf32>, vector<32x80xf32> -> vector<32x80xf32>
    %c0_31 = arith.constant 0 : index
    %c0_32 = arith.constant 0 : index
    %45 = vector.load %arg14[%c0_31, %c0_32] : memref<32x80xf32, #tpu.memory_space<vmem>>, vector<32x80xf32>
    %46 = arith.mulf %44, %45 : vector<32x80xf32>
    %c0_33 = arith.constant 0 : index
    %c0_34 = arith.constant 0 : index
    %47 = vector.load %arg15[%c0_33, %c0_34] : memref<80x5xf32, #tpu.memory_space<vmem>>, vector<80x5xf32>
    %cst_35 = arith.constant dense<0.000000e+00> : vector<32x5xf32>
    %48 = tpu.matmul %46, %47, %cst_35 {dimension_numbers = #tpu.dot_dimension_numbers<[1], [0], [0], [1], [0, 0, 1, 1], [], []>} : vector<32x80xf32>, vector<80x5xf32>, vector<32x5xf32> -> vector<32x5xf32>
    %c0_36 = arith.constant 0 : index
    %c0_37 = arith.constant 0 : index
    %49 = vector.load %arg16[%c0_36, %c0_37] : memref<2x32xf32, #tpu.memory_space<vmem>>, vector<2x32xf32>
    %cst_38 = arith.constant dense<0.000000e+00> : vector<2x5xf32>
    %50 = tpu.matmul %49, %48, %cst_38 {dimension_numbers = #tpu.dot_dimension_numbers<[1], [0], [0], [1], [0, 0, 1, 1], [], []>} : vector<2x32xf32>, vector<32x5xf32>, vector<2x5xf32> -> vector<2x5xf32>
    %c0_39 = arith.constant 0 : index
    %c0_40 = arith.constant 0 : index
    %51 = vector.load %arg11[%c0_39, %c0_40] : memref<1x5xf32, #tpu.memory_space<vmem>>, vector<1x5xf32>
    %52 = vector.broadcast %51 : vector<1x5xf32> to vector<2x5xf32>
    %53 = arith.addf %50, %52 : vector<2x5xf32>
    %c0_41 = arith.constant 0 : index
    %c0_42 = arith.constant 0 : index
    %54 = vector.load %arg17[%c0_41, %c0_42] : memref<2x5xf32, #tpu.memory_space<vmem>>, vector<2x5xf32>
    tpu.vector_store %arg17[%c0_41, %c0_42], %53 {strides = array<i32>} : memref<2x5xf32, #tpu.memory_space<vmem>>, vector<2x5xf32>,
    return
  }
  func.func @transform_0(%arg0: i32) -> (i32, i32) {
    %c0_i32 = arith.constant 0 : i32
    %c0_i32_0 = arith.constant 0 : i32
    %c0_i32_1 = arith.constant 0 : i32
    return %c0_i32, %c0_i32_0 : i32, i32
  }
  func.func @transform_1(%arg0: i32) -> (i32, i32) {
    %c0_i32 = arith.constant 0 : i32
    %c0_i32_0 = arith.constant 0 : i32
    %c0_i32_1 = arith.constant 0 : i32
    return %c0_i32, %c0_i32_0 : i32, i32
  }
  func.func @transform_2(%arg0: i32) -> (i32, i32) {
    %c0_i32 = arith.constant 0 : i32
    %c0_i32_0 = arith.constant 0 : i32
    %c0_i32_1 = arith.constant 0 : i32
    return %c0_i32, %c0_i32_0 : i32, i32
  }
  func.func @transform_3(%arg0: i32) -> (i32, i32) {
    %c0_i32 = arith.constant 0 : i32
    %c0_i32_0 = arith.constant 0 : i32
    %c0_i32_1 = arith.constant 0 : i32
    return %c0_i32, %c0_i32_0 : i32, i32
  }
  func.func @transform_4(%arg0: i32) -> (i32, i32) {
    %c0_i32 = arith.constant 0 : i32
    %c0_i32_0 = arith.constant 0 : i32
    %c0_i32_1 = arith.constant 0 : i32
    return %c0_i32, %c0_i32_0 : i32, i32
  }
  func.func @transform_5(%arg0: i32) -> (i32, i32) {
    %c0_i32 = arith.constant 0 : i32
    %c0_i32_0 = arith.constant 0 : i32
    %c0_i32_1 = arith.constant 0 : i32
    return %c0_i32, %c0_i32_0 : i32, i32
  }
  func.func @transform_6(%arg0: i32) -> (i32, i32) {
    %c0_i32 = arith.constant 0 : i32
    %c0_i32_0 = arith.constant 0 : i32
    %c0_i32_1 = arith.constant 0 : i32
    return %c0_i32, %c0_i32_0 : i32, i32
  }
  func.func @transform_7(%arg0: i32) -> (i32, i32) {
    %c0_i32 = arith.constant 0 : i32
    %c0_i32_0 = arith.constant 0 : i32
    %c0_i32_1 = arith.constant 0 : i32
    return %c0_i32, %c0_i32_0 : i32, i32
  }
  func.func @transform_8(%arg0: i32) -> (i32, i32) {
    %c0_i32 = arith.constant 0 : i32
    %c0_i32_0 = arith.constant 0 : i32
    %c0_i32_1 = arith.constant 0 : i32
    return %c0_i32, %c0_i32_0 : i32, i32
  }
  func.func @transform_9(%arg0: i32) -> (i32, i32) {
    %c0_i32 = arith.constant 0 : i32
    %c0_i32_0 = arith.constant 0 : i32
    %c0_i32_1 = arith.constant 0 : i32
    return %c0_i32, %c0_i32_0 : i32, i32
  }
  func.func @transform_10(%arg0: i32) -> (i32, i32) {
    %c0_i32 = arith.constant 0 : i32
    %c0_i32_0 = arith.constant 0 : i32
    %c0_i32_1 = arith.constant 0 : i32
    return %c0_i32, %c0_i32_0 : i32, i32
  }
  func.func @transform_11(%arg0: i32) -> (i32, i32) {
    %c0_i32 = arith.constant 0 : i32
    %c0_i32_0 = arith.constant 0 : i32
    %c0_i32_1 = arith.constant 0 : i32
    return %c0_i32, %c0_i32_0 : i32, i32
  }
  func.func @transform_12(%arg0: i32) -> (i32, i32) {
    %c0_i32 = arith.constant 0 : i32
    %c0_i32_0 = arith.constant 0 : i32
    %c0_i32_1 = arith.constant 0 : i32
    return %c0_i32, %c0_i32_0 : i32, i32
  }
  func.func @transform_13(%arg0: i32) -> (i32, i32) {
    %c0_i32 = arith.constant 0 : i32
    %c0_i32_0 = arith.constant 0 : i32
    %c0_i32_1 = arith.constant 0 : i32
    return %c0_i32, %c0_i32_0 : i32, i32
  }
  func.func @transform_14(%arg0: i32) -> (i32, i32) {
    %c0_i32 = arith.constant 0 : i32
    %c0_i32_0 = arith.constant 0 : i32
    %c0_i32_1 = arith.constant 0 : i32
    return %c0_i32, %c0_i32_0 : i32, i32
  }
  func.func @transform_15(%arg0: i32) -> (i32, i32) {
    %c0_i32 = arith.constant 0 : i32
    %c0_i32_0 = arith.constant 0 : i32
    %c0_i32_1 = arith.constant 0 : i32
    return %c0_i32, %c0_i32_0 : i32, i32
  }
  func.func @transform_16(%arg0: i32) -> (i32, i32) {
    %c0_i32 = arith.constant 0 : i32
    %c0_i32_0 = arith.constant 0 : i32
    %c0_i32_1 = arith.constant 0 : i32
    return %c0_i32, %c0_i32_0 : i32, i32
  }
}

</mosaic_0001>

<llo_original>
// kernel: tpu_custom_call.1
$region0: #{tpu_custom_call.1}
  #allocation0 [shape = 'u32[]', space=smem, size = 0x4, offset = 0x4, fixed_abs, tag = 'smem constant byte address 0x4 - core index']
  #allocation1 [shape = 'u32[72,128]{1,0:T(1,128)}', space=vmem, size = 0x9000, scoped, tag = 'internal scratch']
  %s0 = inlined_call_operand.vmem [shape: f32[32,4], index: 0, kind: input, shape index: {}]
  %s1 = inlined_call_operand.vmem [shape: f32[12,8], index: 1, kind: input, shape index: {}]
  %s2 = inlined_call_operand.vmem [shape: f32[1,8], index: 2, kind: input, shape index: {}]
  %s3 = inlined_call_operand.vmem [shape: f32[4,8], index: 3, kind: input, shape index: {}]
  %s4 = inlined_call_operand.vmem [shape: f32[1,8], index: 4, kind: input, shape index: {}]
  %s5 = inlined_call_operand.vmem [shape: f32[24,16], index: 5, kind: input, shape index: {}]
  %s6 = inlined_call_operand.vmem [shape: f32[1,16], index: 6, kind: input, shape index: {}]
  %s7 = inlined_call_operand.vmem [shape: f32[8,16], index: 7, kind: input, shape index: {}]
  %s8 = inlined_call_operand.vmem [shape: f32[1,16], index: 8, kind: input, shape index: {}]
  %s9 = inlined_call_operand.vmem [shape: f32[16,80], index: 9, kind: input, shape index: {}]
  %s10 = inlined_call_operand.vmem [shape: f32[1,5], index: 10, kind: input, shape index: {}]
  %s11 = inlined_call_operand.vmem [shape: f32[32,1], index: 11, kind: input, shape index: {}]
  %s12 = inlined_call_operand.vmem [shape: f32[32,1], index: 12, kind: input, shape index: {}]
  %s13 = inlined_call_operand.vmem [shape: f32[32,80], index: 13, kind: input, shape index: {}]
  %s14 = inlined_call_operand.vmem [shape: f32[80,5], index: 14, kind: input, shape index: {}]
  %s15 = inlined_call_operand.vmem [shape: f32[2,32], index: 15, kind: input, shape index: {}]
  %s16 = inlined_call_operand.hbm [shape: f32[2,5], index: 16, kind: output, shape index: {}]
  %s17 = sld [smem:[#allocation0]]
  $region74: #{tpu_custom_call.1} parent=0
    _
  %s19 = ssub.s32 1, %s17
  %s20 = scalar_select 0, %s19, %s17
  $region1: #{tpu_custom_call.1} parent=0
    #allocation2 [shape = 'u8[1024]{0}', space=vmem, size = 0x400, scoped, tag = 'output window, operand 0, single buffered']
    #allocation3 [shape = 's32[1]{0}', space=sflag, size = 0x4, scoped, tag = 'scoped memory for tpu_custom_call.1']
    %21 = vsyncpa [#allocation3], 0
    // Predicated region
    $region2: #{tpu_custom_call.1} parent=1 // pred_check
      _
    $region3: #{tpu_custom_call.1} parent=1 // pred_check_branch
      %23 = sbr.rel (0) target = $region5
    $region4: #{tpu_custom_call.1} parent=1 // pred_region
      _
    $region5: #{tpu_custom_call.1} parent=1 // pred_fallthru
      _
    // Predicated region
    $region6: #{tpu_custom_call.1} parent=1 // pred_check
      _
    $region7: #{tpu_custom_call.1} parent=1 // pred_check_branch
      %25 = sbr.rel (0) target = $region9
    $region8: #{tpu_custom_call.1} parent=1 // pred_region
      _
    $region9: #{tpu_custom_call.1} parent=1 // pred_fallthru
      _
    // Predicated region
    $region10: #{tpu_custom_call.1} parent=1 // pred_check
      _
    $region11: #{tpu_custom_call.1} parent=1 // pred_check_branch
      %27 = sbr.rel (0) target = $region13
    $region12: #{tpu_custom_call.1} parent=1 // pred_region
      _
    $region13: #{tpu_custom_call.1} parent=1 // pred_fallthru
      _
    // Predicated region
    $region14: #{tpu_custom_call.1} parent=1 // pred_check
      _
    $region15: #{tpu_custom_call.1} parent=1 // pred_check_branch
      %29 = sbr.rel (0) target = $region17
    $region16: #{tpu_custom_call.1} parent=1 // pred_region
      _
    $region17: #{tpu_custom_call.1} parent=1 // pred_fallthru
      _
    // Predicated region
    $region18: #{tpu_custom_call.1} parent=1 // pred_check
      _
    $region19: #{tpu_custom_call.1} parent=1 // pred_check_branch
      %31 = sbr.rel (0) target = $region21
    $region20: #{tpu_custom_call.1} parent=1 // pred_region
      _
    $region21: #{tpu_custom_call.1} parent=1 // pred_fallthru
      _
    // Predicated region
    $region22: #{tpu_custom_call.1} parent=1 // pred_check
      _
    $region23: #{tpu_custom_call.1} parent=1 // pred_check_branch
      %33 = sbr.rel (0) target = $region25
    $region24: #{tpu_custom_call.1} parent=1 // pred_region
      _
    $region25: #{tpu_custom_call.1} parent=1 // pred_fallthru
      _
    // Predicated region
    $region26: #{tpu_custom_call.1} parent=1 // pred_check
      _
    $region27: #{tpu_custom_call.1} parent=1 // pred_check_branch
      %35 = sbr.rel (0) target = $region29
    $region28: #{tpu_custom_call.1} parent=1 // pred_region
      _
    $region29: #{tpu_custom_call.1} parent=1 // pred_fallthru
      _
    // Predicated region
    $region30: #{tpu_custom_call.1} parent=1 // pred_check
      _
    $region31: #{tpu_custom_call.1} parent=1 // pred_check_branch
      %37 = sbr.rel (0) target = $region33
    $region32: #{tpu_custom_call.1} parent=1 // pred_region
      _
    $region33: #{tpu_custom_call.1} parent=1 // pred_fallthru
      _
    // Predicated region
    $region34: #{tpu_custom_call.1} parent=1 // pred_check
      _
    $region35: #{tpu_custom_call.1} parent=1 // pred_check_branch
      %39 = sbr.rel (0) target = $region37
    $region36: #{tpu_custom_call.1} parent=1 // pred_region
      _
    $region37: #{tpu_custom_call.1} parent=1 // pred_fallthru
      _
    // Predicated region
    $region38: #{tpu_custom_call.1} parent=1 // pred_check
      _
    $region39: #{tpu_custom_call.1} parent=1 // pred_check_branch
      %41 = sbr.rel (0) target = $region41
    $region40: #{tpu_custom_call.1} parent=1 // pred_region
      _
    $region41: #{tpu_custom_call.1} parent=1 // pred_fallthru
      _
    // Predicated region
    $region42: #{tpu_custom_call.1} parent=1 // pred_check
      _
    $region43: #{tpu_custom_call.1} parent=1 // pred_check_branch
      %43 = sbr.rel (0) target = $region45
    $region44: #{tpu_custom_call.1} parent=1 // pred_region
      _
    $region45: #{tpu_custom_call.1} parent=1 // pred_fallthru
      _
    // Predicated region
    $region46: #{tpu_custom_call.1} parent=1 // pred_check
      _
    $region47: #{tpu_custom_call.1} parent=1 // pred_check_branch
      %45 = sbr.rel (0) target = $region49
    $region48: #{tpu_custom_call.1} parent=1 // pred_region
      _
    $region49: #{tpu_custom_call.1} parent=1 // pred_fallthru
      _
    // Predicated region
    $region50: #{tpu_custom_call.1} parent=1 // pred_check
      _
    $region51: #{tpu_custom_call.1} parent=1 // pred_check_branch
      %47 = sbr.rel (0) target = $region53
    $region52: #{tpu_custom_call.1} parent=1 // pred_region
      _
    $region53: #{tpu_custom_call.1} parent=1 // pred_fallthru
      _
    // Predicated region
    $region54: #{tpu_custom_call.1} parent=1 // pred_check
      _
    $region55: #{tpu_custom_call.1} parent=1 // pred_check_branch
      %49 = sbr.rel (0) target = $region57
    $region56: #{tpu_custom_call.1} parent=1 // pred_region
      _
    $region57: #{tpu_custom_call.1} parent=1 // pred_fallthru
      _
    // Predicated region
    $region58: #{tpu_custom_call.1} parent=1 // pred_check
      _
    $region59: #{tpu_custom_call.1} parent=1 // pred_check_branch
      %51 = sbr.rel (0) target = $region61
    $region60: #{tpu_custom_call.1} parent=1 // pred_region
      _
    $region61: #{tpu_custom_call.1} parent=1 // pred_fallthru
      _
    // Predicated region
    $region62: #{tpu_custom_call.1} parent=1 // pred_check
      _
    $region63: #{tpu_custom_call.1} parent=1 // pred_check_branch
      %53 = sbr.rel (0) target = $region65
    $region64: #{tpu_custom_call.1} parent=1 // pred_region
      _
    $region65: #{tpu_custom_call.1} parent=1 // pred_fallthru
      _
    %v54 = vld [vmem:[%s0] sm:$0xff]
    %v55 = vld [vmem:[%s0 + $0x8] sm:$0xff]
    %v56 = vld [vmem:[%s0 + $0x10] sm:$0xff]
    %v57 = vld [vmem:[%s0 + $0x18] sm:$0xff]
    %v58 = vld [vmem:[%s11] sm:$0xff]
    %v59 = vld [vmem:[%s11 + $0x8] sm:$0xff]
    %v60 = vld [vmem:[%s11 + $0x10] sm:$0xff]
    %v61 = vld [vmem:[%s11 + $0x18] sm:$0xff]
    %v62 = vld [vmem:[%s12] sm:$0xff]
    %v63 = vld [vmem:[%s12 + $0x8] sm:$0xff]
    %v64 = vld [vmem:[%s12 + $0x10] sm:$0xff]
    %v65 = vld [vmem:[%s12 + $0x18] sm:$0xff]
    %v66 = vld [vmem:[%s3] sm:$0xf]
    %v67 = vld [vmem:[%s4] sm:$0x1]
    %v69 = vperm.slane %v67, 0
    %vm71 = vcmask 31744
    %v73 = vsel %vm71, %v54, 0
    %v76 = vsel %vm71, %v55, 0
    %v79 = vsel %vm71, %v56, 0
    %v82 = vsel %vm71, %v57, 0
    %vm84 = vcmask 1043456
    %v86 = vsel %vm84, %v66, 0
    %88 = vmatpush.msra.mxu0 0.0
    %89 = vmatpush.msra.mxu0 0.0
    %90 = vmatpush.msra.mxu0 0.0
    %91 = vmatpush.msra.mxu0 0.0
    %92 = vmatpush.msra.mxu0 0.0
    %93 = vmatpush.msra.mxu0 0.0
    %94 = vmatpush.msra.mxu0 0.0
    %95 = vmatpush.msra.mxu0 0.0
    %96 = vmatpush.msra.mxu0 0.0
    %97 = vmatpush.msra.mxu0 0.0
    %98 = vmatpush.msra.mxu0 0.0
    %99 = vmatpush.msra.mxu0 0.0
    %100 = vmatpush.msra.mxu0 0.0
    %101 = vmatpush.msra.mxu0 0.0
    %102 = vmatpush.msra.mxu0 0.0
    %103 = vmatpush.msra.mxu0 %v86
    %104 = vmatmul.f32.gmra.mxu0 %v73
    %v105 = vpop.f32.mrf.mxu0
    %v106 = vadd.f32 %v69, %v105
    %107 = vmatmul.f32.gmra.mxu0 %v76
    %v108 = vpop.f32.mrf.mxu0
    %v109 = vadd.f32 %v69, %v108
    %110 = vmatmul.f32.gmra.mxu0 %v79
    %v111 = vpop.f32.mrf.mxu0
    %v112 = vadd.f32 %v69, %v111
    %113 = vmatmul.f32.gmra.mxu0 %v82
    %v114 = vpop.f32.mrf.mxu0
    %v115 = vadd.f32 %v69, %v114
    %116 = vdwg.mxu0
    %v117 = vrot.slane %v54, 7
    %v118 = vrot.slane %v55, 7
    %v119 = vrot.slane %v56, 7
    %v120 = vrot.slane %v57, 7
    %v121 = vlaneseq
    %v122 = vshrl.u32 %v121, 7
    %vm123 = vcmp.lt.s32.totalorder %v122, 1
    %v124 = vsel %vm123, %v119, %v120
    %v125 = vsel %vm123, %v118, %v119
    %v126 = vsel %vm123, %v117, %v118
    %v127 = vsel %vm123, %v120, %v117
    %129 = vset.pattern.permute.xlu0 0
    %130 = vperm.xlu0 %129, %v58
    %v131 = vpop.permute.xlu0 %130
    %134 = vset.pattern.permute.xlu0 0
    %135 = vperm.xlu0 %134, %v59
    %v136 = vpop.permute.xlu0 %135
    %139 = vset.pattern.permute.xlu0 0
    %140 = vperm.xlu0 %139, %v60
    %v141 = vpop.permute.xlu0 %140
    %144 = vset.pattern.permute.xlu0 0
    %145 = vperm.xlu0 %144, %v61
    %v146 = vpop.permute.xlu0 %145
    %v148 = vmul.f32 %v127, %v131
    %v149 = vmul.f32 %v126, %v136
    %v150 = vmul.f32 %v125, %v141
    %v151 = vmul.f32 %v124, %v146
    %v152 = vrot.slane %v54, 1
    %v153 = vrot.slane %v55, 1
    %v154 = vrot.slane %v56, 1
    %v155 = vrot.slane %v57, 1
    %vm156 = vcmp.lt.s32.totalorder %v122, 7
    %v157 = vsel %vm156, %v154, %v155
    %v158 = vsel %vm156, %v153, %v154
    %v159 = vsel %vm156, %v152, %v153
    %v160 = vsel %vm156, %v155, %v152
    %162 = vset.pattern.permute.xlu0 0
    %163 = vperm.xlu0 %162, %v62
    %v164 = vpop.permute.xlu0 %163
    %167 = vset.pattern.permute.xlu0 0
    %168 = vperm.xlu0 %167, %v63
    %v169 = vpop.permute.xlu0 %168
    %172 = vset.pattern.permute.xlu0 0
    %173 = vperm.xlu0 %172, %v64
    %v174 = vpop.permute.xlu0 %173
    %177 = vset.pattern.permute.xlu0 0
    %178 = vperm.xlu0 %177, %v65
    %v179 = vpop.permute.xlu0 %178
    %v181 = vmul.f32 %v159, %v164
    %v182 = vmul.f32 %v158, %v169
    %v183 = vmul.f32 %v157, %v174
    %v184 = vmul.f32 %v160, %v179
    %185 = vrot.lane.b32.xlu0 %v54, 4
    %v186 = vpop.permute.xlu0 %185
    %187 = vrot.lane.b32.xlu0 %v55, 4
    %v188 = vpop.permute.xlu0 %187
    %189 = vrot.lane.b32.xlu0 %v56, 4
    %v190 = vpop.permute.xlu0 %189
    %191 = vrot.lane.b32.xlu0 %v57, 4
    %v192 = vpop.permute.xlu0 %191
    %201 = vrot.lane.b32.xlu0 %v181, 8
    %v202 = vpop.permute.xlu0 %201
    %203 = vrot.lane.b32.xlu0 %v182, 8
    %v204 = vpop.permute.xlu0 %203
    %205 = vrot.lane.b32.xlu0 %v183, 8
    %v206 = vpop.permute.xlu0 %205
    %207 = vrot.lane.b32.xlu0 %v184, 8
    %v208 = vpop.permute.xlu0 %207
    %v213 = vsel %vm71, %v148, %v186
    %v214 = vsel %vm71, %v149, %v188
    %v215 = vsel %vm71, %v150, %v190
    %v216 = vsel %vm71, %v151, %v192
    %vm217 = vcmask 64512
    %v218 = vsel %vm217, %v213, %v202
    %v219 = vsel %vm217, %v214, %v204
    %v220 = vsel %vm217, %v215, %v206
    %v221 = vsel %vm217, %v216, %v208
    %v222 = vld [vmem:[%s1] sm:$0xff]
    %v223 = vld [vmem:[%s1 + $0x8] sm:$0xf]
    %v224 = vld [vmem:[%s2] sm:$0x1]
    %v226 = vperm.slane %v224, 0
    %vm228 = vcmask 97280
    %v230 = vsel %vm228, %v218, 0
    %v233 = vsel %vm228, %v219, 0
    %v236 = vsel %vm228, %v220, 0
    %v239 = vsel %vm228, %v221, 0
    %v242 = vsel %vm84, %v223, 0
    %244 = vmatpush.msra.mxu0 0.0
    %245 = vmatpush.msra.mxu0 0.0
    %246 = vmatpush.msra.mxu0 0.0
    %247 = vmatpush.msra.mxu0 0.0
    %248 = vmatpush.msra.mxu0 0.0
    %249 = vmatpush.msra.mxu0 0.0
    %250 = vmatpush.msra.mxu0 0.0
    %251 = vmatpush.msra.mxu0 0.0
    %252 = vmatpush.msra.mxu0 0.0
    %253 = vmatpush.msra.mxu0 0.0
    %254 = vmatpush.msra.mxu0 0.0
    %255 = vmatpush.msra.mxu0 0.0
    %256 = vmatpush.msra.mxu0 0.0
    %257 = vmatpush.msra.mxu0 0.0
    %258 = vmatpush.msra.mxu0 %v242
    %259 = vmatpush.msra.mxu0 %v222
    %260 = vmatmul.f32.gmra.mxu0 %v230
    %v261 = vpop.f32.mrf.mxu0
    %v262 = vadd.f32 %v226, %v261
    %263 = vmatmul.f32.gmra.mxu0 %v233
    %v264 = vpop.f32.mrf.mxu0
    %v265 = vadd.f32 %v226, %v264
    %266 = vmatmul.f32.gmra.mxu0 %v236
    %v267 = vpop.f32.mrf.mxu0
    %v268 = vadd.f32 %v226, %v267
    %269 = vmatmul.f32.gmra.mxu0 %v239
    %v270 = vpop.f32.mrf.mxu0
    %v271 = vadd.f32 %v226, %v270
    %272 = vdwg.mxu0
    %v273 = vmax.f32 %v262, 0.0
    %v274 = vmax.f32 %v265, 0.0
    %v275 = vmax.f32 %v268, 0.0
    %v276 = vmax.f32 %v271, 0.0
    %v277 = vadd.f32 %v273, %v106
    %v278 = vadd.f32 %v274, %v109
    %v279 = vadd.f32 %v275, %v112
    %v280 = vadd.f32 %v276, %v115
    %v281 = vld [vmem:[%s7] sm:$0xff]
    %v282 = vld [vmem:[%s8] sm:$0x1]
    %v284 = vperm.slane %v282, 0
    %v287 = vsel %vm217, %v277, 0
    %v290 = vsel %vm217, %v278, 0
    %v293 = vsel %vm217, %v279, 0
    %v296 = vsel %vm217, %v280, 0
    %298 = vmatpush.msra.mxu0 0.0
    %299 = vmatpush.msra.mxu0 0.0
    %300 = vmatpush.msra.mxu0 0.0
    %301 = vmatpush.msra.mxu0 0.0
    %302 = vmatpush.msra.mxu0 0.0
    %303 = vmatpush.msra.mxu0 0.0
    %304 = vmatpush.msra.mxu0 0.0
    %305 = vmatpush.msra.mxu0 0.0
    %306 = vmatpush.msra.mxu0 0.0
    %307 = vmatpush.msra.mxu0 0.0
    %308 = vmatpush.msra.mxu0 0.0
    %309 = vmatpush.msra.mxu0 0.0
    %310 = vmatpush.msra.mxu0 0.0
    %311 = vmatpush.msra.mxu0 0.0
    %312 = vmatpush.msra.mxu0 0.0
    %313 = vmatpush.msra.mxu0 %v281
    %314 = vmatmul.f32.gmra.mxu0 %v287
    %v315 = vpop.f32.mrf.mxu0
    %v316 = vadd.f32 %v284, %v315
    %317 = vmatmul.f32.gmra.mxu0 %v290
    %v318 = vpop.f32.mrf.mxu0
    %v319 = vadd.f32 %v284, %v318
    %320 = vmatmul.f32.gmra.mxu0 %v293
    %v321 = vpop.f32.mrf.mxu0
    %v322 = vadd.f32 %v284, %v321
    %323 = vmatmul.f32.gmra.mxu0 %v296
    %v324 = vpop.f32.mrf.mxu0
    %v325 = vadd.f32 %v284, %v324
    %326 = vdwg.mxu0
    %v327 = vrot.slane %v277, 7
    %v328 = vrot.slane %v278, 7
    %v329 = vrot.slane %v279, 7
    %v330 = vrot.slane %v280, 7
    %v331 = vsel %vm123, %v329, %v330
    %v332 = vsel %vm123, %v328, %v329
    %v333 = vsel %vm123, %v327, %v328
    %v334 = vsel %vm123, %v330, %v327
    %v335 = vmul.f32 %v334, %v131
    %v336 = vmul.f32 %v333, %v136
    %v337 = vmul.f32 %v332, %v141
    %v338 = vmul.f32 %v331, %v146
    %v339 = vrot.slane %v277, 1
    %v340 = vrot.slane %v278, 1
    %v341 = vrot.slane %v279, 1
    %v342 = vrot.slane %v280, 1
    %v343 = vsel %vm156, %v341, %v342
    %v344 = vsel %vm156, %v340, %v341
    %v345 = vsel %vm156, %v339, %v340
    %v346 = vsel %vm156, %v342, %v339
    %v347 = vmul.f32 %v345, %v164
    %v348 = vmul.f32 %v344, %v169
    %v349 = vmul.f32 %v343, %v174
    %v350 = vmul.f32 %v346, %v179
    %351 = vrot.lane.b32.xlu0 %v277, 8
    %v352 = vpop.permute.xlu0 %351
    %353 = vrot.lane.b32.xlu0 %v278, 8
    %v354 = vpop.permute.xlu0 %353
    %355 = vrot.lane.b32.xlu0 %v279, 8
    %v356 = vpop.permute.xlu0 %355
    %357 = vrot.lane.b32.xlu0 %v280, 8
    %v358 = vpop.permute.xlu0 %357
    %367 = vrot.lane.b32.xlu0 %v347, 16
    %v368 = vpop.permute.xlu0 %367
    %369 = vrot.lane.b32.xlu0 %v348, 16
    %v370 = vpop.permute.xlu0 %369
    %371 = vrot.lane.b32.xlu0 %v349, 16
    %v372 = vpop.permute.xlu0 %371
    %373 = vrot.lane.b32.xlu0 %v350, 16
    %v374 = vpop.permute.xlu0 %373
    %v379 = vsel %vm217, %v335, %v352
    %v380 = vsel %vm217, %v336, %v354
    %v381 = vsel %vm217, %v337, %v356
    %v382 = vsel %vm217, %v338, %v358
    %vm383 = vcmask 130048
    %v384 = vsel %vm383, %v379, %v368
    %v385 = vsel %vm383, %v380, %v370
    %v386 = vsel %vm383, %v381, %v372
    %v387 = vsel %vm383, %v382, %v374
    %v388 = vld [vmem:[%s5] sm:$0xff]
    %v389 = vld [vmem:[%s5 + $0x8] sm:$0xff]
    %v390 = vld [vmem:[%s5 + $0x10] sm:$0xff]
    %v391 = vld [vmem:[%s6] sm:$0x1]
    %v393 = vperm.slane %v391, 0
    %vm395 = vcmask 195584
    %v397 = vsel %vm395, %v384, 0
    %v400 = vsel %vm395, %v385, 0
    %v403 = vsel %vm395, %v386, 0
    %v406 = vsel %vm395, %v387, 0
    %408 = vmatpush.msra.mxu0 0.0
    %409 = vmatpush.msra.mxu0 0.0
    %410 = vmatpush.msra.mxu0 0.0
    %411 = vmatpush.msra.mxu0 0.0
    %412 = vmatpush.msra.mxu0 0.0
    %413 = vmatpush.msra.mxu0 0.0
    %414 = vmatpush.msra.mxu0 0.0
    %415 = vmatpush.msra.mxu0 0.0
    %416 = vmatpush.msra.mxu0 0.0
    %417 = vmatpush.msra.mxu0 0.0
    %418 = vmatpush.msra.mxu0 0.0
    %419 = vmatpush.msra.mxu0 0.0
    %420 = vmatpush.msra.mxu0 0.0
    %421 = vmatpush.msra.mxu0 %v390
    %422 = vmatpush.msra.mxu0 %v389
    %423 = vmatpush.msra.mxu0 %v388
    %424 = vmatmul.f32.gmra.mxu0 %v397
    %v425 = vpop.f32.mrf.mxu0
    %v426 = vadd.f32 %v393, %v425
    %427 = vmatmul.f32.gmra.mxu0 %v400
    %v428 = vpop.f32.mrf.mxu0
    %v429 = vadd.f32 %v393, %v428
    %430 = vmatmul.f32.gmra.mxu0 %v403
    %v431 = vpop.f32.mrf.mxu0
    %v432 = vadd.f32 %v393, %v431
    %433 = vmatmul.f32.gmra.mxu0 %v406
    %v434 = vpop.f32.mrf.mxu0
    %v435 = vadd.f32 %v393, %v434
    %436 = vdwg.mxu0
    %v437 = vmax.f32 %v426, 0.0
    %v438 = vmax.f32 %v429, 0.0
    %v439 = vmax.f32 %v432, 0.0
    %v440 = vmax.f32 %v435, 0.0
    %v441 = vadd.f32 %v437, %v316
    %v442 = vadd.f32 %v438, %v319
    %v443 = vadd.f32 %v439, %v322
    %v444 = vadd.f32 %v440, %v325
    %v445 = vld [vmem:[%s9] sm:$0xff]
    %v446 = vld [vmem:[%s9 + $0x8] sm:$0xff]
    %v448 = vsel %vm383, %v441, 0
    %v451 = vsel %vm383, %v442, 0
    %v454 = vsel %vm383, %v443, 0
    %v457 = vsel %vm383, %v444, 0
    %459 = vmatpush.msra.mxu0 0.0
    %460 = vmatpush.msra.mxu0 0.0
    %461 = vmatpush.msra.mxu0 0.0
    %462 = vmatpush.msra.mxu0 0.0
    %463 = vmatpush.msra.mxu0 0.0
    %464 = vmatpush.msra.mxu0 0.0
    %465 = vmatpush.msra.mxu0 0.0
    %466 = vmatpush.msra.mxu0 0.0
    %467 = vmatpush.msra.mxu0 0.0
    %468 = vmatpush.msra.mxu0 0.0
    %469 = vmatpush.msra.mxu0 0.0
    %470 = vmatpush.msra.mxu0 0.0
    %471 = vmatpush.msra.mxu0 0.0
    %472 = vmatpush.msra.mxu0 0.0
    %473 = vmatpush.msra.mxu0 %v446
    %474 = vmatpush.msra.mxu0 %v445
    %475 = vmatmul.f32.gmra.mxu0 %v448
    %v476 = vpop.f32.mrf.mxu0
    %v477 = vadd.f32 0.0, %v476
    %478 = vmatmul.f32.gmra.mxu0 %v451
    %v479 = vpop.f32.mrf.mxu0
    %v480 = vadd.f32 0.0, %v479
    %481 = vmatmul.f32.gmra.mxu0 %v454
    %v482 = vpop.f32.mrf.mxu0
    %v483 = vadd.f32 0.0, %v482
    %484 = vmatmul.f32.gmra.mxu0 %v457
    %v485 = vpop.f32.mrf.mxu0
    %v486 = vadd.f32 0.0, %v485
    %487 = vdwg.mxu0
    %v488 = vld [vmem:[%s13] sm:$0xff]
    %v489 = vld [vmem:[%s13 + $0x8] sm:$0xff]
    %v490 = vld [vmem:[%s13 + $0x10] sm:$0xff]
    %v491 = vld [vmem:[%s13 + $0x18] sm:$0xff]
    %v492 = vmul.f32 %v477, %v488
    %v493 = vmul.f32 %v480, %v489
    %v494 = vmul.f32 %v483, %v490
    %v495 = vmul.f32 %v486, %v491
    %v496 = vld [vmem:[%s14] sm:$0xff]
    %v497 = vld [vmem:[%s14 + $0x8] sm:$0xff]
    %v498 = vld [vmem:[%s14 + $0x10] sm:$0xff]
    %v499 = vld [vmem:[%s14 + $0x18] sm:$0xff]
    %v500 = vld [vmem:[%s14 + $0x20] sm:$0xff]
    %v501 = vld [vmem:[%s14 + $0x28] sm:$0xff]
    %v502 = vld [vmem:[%s14 + $0x30] sm:$0xff]
    %v503 = vld [vmem:[%s14 + $0x38] sm:$0xff]
    %v504 = vld [vmem:[%s14 + $0x40] sm:$0xff]
    %v505 = vld [vmem:[%s14 + $0x48] sm:$0xff]
    %vm506 = vcmask 654336
    %v508 = vsel %vm506, %v492, 0
    %v511 = vsel %vm506, %v493, 0
    %v514 = vsel %vm506, %v494, 0
    %v517 = vsel %vm506, %v495, 0
    %519 = vmatpush.msra.mxu0 0.0
    %520 = vmatpush.msra.mxu0 0.0
    %521 = vmatpush.msra.mxu0 0.0
    %522 = vmatpush.msra.mxu0 0.0
    %523 = vmatpush.msra.mxu0 0.0
    %524 = vmatpush.msra.mxu0 0.0
    %525 = vmatpush.msra.mxu0 %v505
    %526 = vmatpush.msra.mxu0 %v504
    %527 = vmatpush.msra.mxu0 %v503
    %528 = vmatpush.msra.mxu0 %v502
    %529 = vmatpush.msra.mxu0 %v501
    %530 = vmatpush.msra.mxu0 %v500
    %531 = vmatpush.msra.mxu0 %v499
    %532 = vmatpush.msra.mxu0 %v498
    %533 = vmatpush.msra.mxu0 %v497
    %534 = vmatpush.msra.mxu0 %v496
    %535 = vmatmul.f32.gmra.mxu0 %v508
    %v536 = vpop.f32.mrf.mxu0
    %v537 = vadd.f32 0.0, %v536
    %538 = vmatmul.f32.gmra.mxu0 %v511
    %v539 = vpop.f32.mrf.mxu0
    %v540 = vadd.f32 0.0, %v539
    %541 = vmatmul.f32.gmra.mxu0 %v514
    %v542 = vpop.f32.mrf.mxu0
    %v543 = vadd.f32 0.0, %v542
    %544 = vmatmul.f32.gmra.mxu0 %v517
    %v545 = vpop.f32.mrf.mxu0
    %v546 = vadd.f32 0.0, %v545
    %547 = vdwg.mxu0
    %v548 = vld [vmem:[%s15] sm:$0x3]
    %v549 = vld [vmem:[%s10] sm:$0x1]
    %v551 = vperm.slane %v549, 0
    %vm553 = vcmask 261120
    %v555 = vsel %vm553, %v548, 0
    %557 = vmatpush.msra.mxu0 0.0
    %558 = vmatpush.msra.mxu0 0.0
    %559 = vmatpush.msra.mxu0 0.0
    %560 = vmatpush.msra.mxu0 0.0
    %561 = vmatpush.msra.mxu0 0.0
    %562 = vmatpush.msra.mxu0 0.0
    %563 = vmatpush.msra.mxu0 0.0
    %564 = vmatpush.msra.mxu0 0.0
    %565 = vmatpush.msra.mxu0 0.0
    %566 = vmatpush.msra.mxu0 0.0
    %567 = vmatpush.msra.mxu0 0.0
    %568 = vmatpush.msra.mxu0 0.0
    %569 = vmatpush.msra.mxu0 %v546
    %570 = vmatpush.msra.mxu0 %v543
    %571 = vmatpush.msra.mxu0 %v540
    %572 = vmatpush.msra.mxu0 %v537
    %573 = vmatmul.f32.gmra.mxu0 %v555
    %v574 = vpop.f32.mrf.mxu0
    %v575 = vadd.f32 %v551, %v574
    %576 = vdwg.mxu0
    %vm577 = vcmask 33792
    %578 = vst.msk [vmem:[#allocation2] sm:$0x3] %vm577, %v575
    // Predicated region
    $region66: #{tpu_custom_call.1} parent=1 // pred_check
      _
    $region67: #{tpu_custom_call.1} parent=1 // pred_check_branch
      %580 = sbr.rel (0) target = $region69
    $region68: #{tpu_custom_call.1} parent=1 // pred_region
      %582 = vsyncadd [#allocation3], 0
      %s584 = sshll.u32 [#allocation2], 4
      %s585 = int_to_ptr.vmem [resolvable:$true] %s584
      %s586 = sshll.u32 %s16, 4
      %s587 = int_to_ptr.hbm [resolvable:$true] %s586
      %589 = dma.vmem_to_hbm [thread:$0]  %s585, 32, %s587, [#allocation3]
    $region69: #{tpu_custom_call.1} parent=1 // pred_fallthru
      _
    // Predicated region
    $region70: #{tpu_custom_call.1} parent=1 // pred_check
      _
    $region71: #{tpu_custom_call.1} parent=1 // pred_check_branch
      %591 = sbr.rel (0) target = $region73
    $region72: #{tpu_custom_call.1} parent=1 // pred_region
      %593 = dma.done [#allocation3], 32
    $region73: #{tpu_custom_call.1} parent=1 // pred_fallthru
      _
    %594 = vsyncpa [#allocation3], 1

</llo_original>
